<compile_context>
chip_gen: v7x
topology: tpu7x:2x2x1
jax: 0.10.0
libtpu: 0.0.40
codegen_flags: <defaults>
</compile_context>

<pallas_src>
import functools
import math

import jax
import jax.numpy as jnp
from jax import lax
from jax.experimental import pallas as pl
from jax.experimental.pallas import tpu as pltpu

INV_SQRT2 = 1.0 / math.sqrt(2.0)   # multiply (VPU) instead of divide
LN_EPS = 1e-5                      # nn.LayerNorm default


def _round_up(x, m):
    return (x + m - 1) // m * m


# ---------------------------------------------------------------------------
# One-time (import) feature / hardware detection — never per call.
# ---------------------------------------------------------------------------
def _detect_buffered_support():
    """Check once whether pipeline_mode=pl.Buffered(1) lowers on this build."""
    if not hasattr(pl, "Buffered"):
        return False
    try:
        spec = pl.BlockSpec((8, 128), lambda i: (0, 0), pipeline_mode=pl.Buffered(1))

        def _copy(x_ref, o_ref):
            o_ref[...] = x_ref[...]

        fn = pl.pallas_call(
            _copy,
            out_shape=jax.ShapeDtypeStruct((8, 128), jnp.float32),
            grid=(1,),
            in_specs=[spec],
            out_specs=pl.BlockSpec((8, 128), lambda i: (0, 0)),
        )
        jax.jit(fn).lower(jax.ShapeDtypeStruct((8, 128), jnp.float32)).compile()
        return True
    except Exception:
        return False


def _vmem_budget_bytes():
    """~80% of physical VMEM per TensorCore (generation aware), safe fallback."""
    try:
        cap = int(pltpu.get_tpu_info().vmem_capacity_bytes)
    except Exception:
        cap = 64 * 1024 * 1024  # conservative (v7x-sized) fallback
    return int(cap * 0.8)


_HAS_BUFFERED = _detect_buffered_support()
_VMEM_BUDGET = _vmem_budget_bytes()


# ---------------------------------------------------------------------------
# Kernel body: fc1 -> erf GELU -> LayerNorm -> fc2, all on one row tile.
# ---------------------------------------------------------------------------
def _ffn_kernel(x_ref, w1_ref, b1_ref, g_ref, beta_ref, w2_ref, b2_ref, o_ref):
    # TODO(synk): nn.Dropout is identity in eval/inference mode; no RNG masking.

    # fc1 on the MXU in the operands' native dtype (bf16 stays bf16), f32 acc.
    h = jnp.dot(x_ref[...], w1_ref[...], preferred_element_type=jnp.float32)
    h = h + b1_ref[...].astype(jnp.float32)

    # Exact erf-based GELU (matches the PyTorch reference), f32.
    h = h * (0.5 * (1.0 + lax.erf(h * INV_SQRT2)))

    # Single-pass LayerNorm statistics: sum and sum-of-squares together (f32),
    # biased variance like torch, eps = 1e-5.
    inv_d = 1.0 / h.shape[-1]
    mean = jnp.sum(h, axis=-1, keepdims=True) * inv_d
    mean_sq = jnp.sum(h * h, axis=-1, keepdims=True) * inv_d
    var = jnp.maximum(mean_sq - mean * mean, 0.0)
    h = (h - mean) * lax.rsqrt(var + LN_EPS)
    h = h * g_ref[...].astype(jnp.float32) + beta_ref[...].astype(jnp.float32)

    # fc2: cast back to the weight dtype for the MXU, accumulate in f32.
    out = jnp.dot(h.astype(w2_ref.dtype), w2_ref[...],
                  preferred_element_type=jnp.float32)
    o_ref[...] = (out + b2_ref[...].astype(jnp.float32)).astype(o_ref.dtype)


# ---------------------------------------------------------------------------
# Row-tile selection: largest MXU-friendly tile that fits the VMEM budget,
# shrunk so the "parallel" row axis gets >= 2 grid steps when M allows it.
# ---------------------------------------------------------------------------
def _pick_row_tile(M, D_in, D_h, D_out, act_bytes, out_bytes, w_bytes, budget):
    weights = (D_in * D_h + D_h * D_out) * w_bytes
    if not _HAS_BUFFERED:
        weights *= 2  # weights get double-buffered without Buffered(1)
    small = 2 * (3 * D_h + D_out) * 4

    row_tile = 8
    for cand in (1024, 512, 256, 128, 64, 32, 16, 8):
        tile_bytes = (
            2 * cand * D_in * act_bytes      # x tile (double-buffered)
            + 2 * cand * D_out * out_bytes   # out tile (double-buffered)
            + 3 * cand * D_h * 4             # f32 h + LN temp + cast copy
        )
        if weights + small + tile_bytes <= budget:
            row_tile = cand
            break

    row_tile = min(row_tile, max(8, _round_up(M, 8)))   # no wider than the data
    if M > 8:
        # >= 2 grid steps: shards across both TensorCores on v7x and lets the
        # pipeline overlap DMA with compute.
        row_tile = min(row_tile, max(8, _round_up(pl.cdiv(M, 2), 8)))
    return row_tile


@functools.lru_cache(maxsize=None)
def _build_ffn_call(M, D_in, D_h, D_out, act_dtype_name, w_dtype_name,
                    out_dtype_name):
    act_dtype = jnp.dtype(act_dtype_name)
    w_dtype = jnp.dtype(w_dtype_name)
    out_dtype = jnp.dtype(out_dtype_name)

    row_tile = _pick_row_tile(M, D_in, D_h, D_out,
                              act_dtype.itemsize, out_dtype.itemsize,
                              w_dtype.itemsize, _VMEM_BUDGET)
    grid = (pl.cdiv(M, row_tile),)

    # Resident (constant index_map) operands: single VMEM copy when supported.
    def const_spec(shape):
        kw = {"pipeline_mode": pl.Buffered(1)} if _HAS_BUFFERED else {}
        return pl.BlockSpec(shape, lambda i: (0, 0), **kw)

    # TODO(synk): for v7x with transformer-sized D_h (resident weights > ~50MiB),
    # add a D_h-tiled path (fc1 N-tiling / fc2 K-tiling with a masked two-pass
    # LayerNorm) instead of relying on fully resident weights.
    # TODO(synk): for odd feature dims on v6e/v7x, a module-construction-time
    # (cached) pad of W1/W2 to 256-multiples would improve MXU utilization.

    cost = pl.CostEstimate(
        flops=2 * M * (D_in * D_h + D_h * D_out),
        transcendentals=M * D_h,  # one erf per hidden element
        bytes_accessed=int(
            M * D_in * act_dtype.itemsize
            + M * D_out * out_dtype.itemsize
            + (D_in * D_h + D_h * D_out) * w_dtype.itemsize
            + (3 * D_h + D_out) * 4
        ),
    )

    return pl.pallas_call(
        _ffn_kernel,
        out_shape=jax.ShapeDtypeStruct((M, D_out), out_dtype),
        grid_spec=pltpu.PrefetchScalarGridSpec(
            num_scalar_prefetch=0,
            grid=grid,
            in_specs=[
                pl.BlockSpec((row_tile, D_in), lambda i: (i, 0)),  # x (pipelined)
                const_spec((D_in, D_h)),    # W1 (resident)
                const_spec((1, D_h)),       # b1
                const_spec((1, D_h)),       # ln gamma
                const_spec((1, D_h)),       # ln beta
                const_spec((D_h, D_out)),   # W2 (resident)
                const_spec((1, D_out)),     # b2
            ],
            out_specs=pl.BlockSpec((row_tile, D_out), lambda i: (i, 0)),
        ),
        compiler_params=pltpu.CompilerParams(
            dimension_semantics=("parallel",),
            vmem_limit_bytes=_VMEM_BUDGET,
        ),
        cost_estimate=cost,
    )


def ffn_layer(x, w1, b1, gamma, beta, w2, b2, *, mxu_dtype=None):
    """x: [B, S, D_in]; w1: [D_in, D_h]; w2: [D_h, D_out] (pre-transposed).

    Returns lazily (no sync) so it composes under an outer jit.
    """
    B, S, D_in = x.shape
    D_h = w1.shape[1]
    D_out = w2.shape[1]
    out_dtype = x.dtype

    if mxu_dtype is not None:
        # Optional reduced-precision MXU path; GELU/LayerNorm math stays f32.
        x = x.astype(mxu_dtype)
        w1 = w1.astype(mxu_dtype)
        w2 = w2.astype(mxu_dtype)

    call = _build_ffn_call(
        B * S, D_in, D_h, D_out,
        jnp.dtype(x.dtype).name, jnp.dtype(w1.dtype).name,
        jnp.dtype(out_dtype).name,
    )
    out2 = call(
        x.reshape(B * S, D_in),
        w1,
        b1.reshape(1, D_h),
        gamma.reshape(1, D_h),
        beta.reshape(1, D_h),
        w2,
        b2.reshape(1, D_out),
    )
    return out2.reshape(B, S, D_out)


def ffn_reference(x, w1, b1, gamma, beta, w2, b2):
    h = jnp.einsum("bsd,dh->bsh", x.astype(jnp.float32), w1.astype(jnp.float32)) + b1
    h = h * 0.5 * (1.0 + lax.erf(h * INV_SQRT2))
    mean = jnp.mean(h, axis=-1, keepdims=True)
    var = jnp.mean((h - mean) ** 2, axis=-1, keepdims=True)
    h = (h - mean) * lax.rsqrt(var + LN_EPS) * gamma + beta
    return jnp.einsum("bsh,ho->bso", h, w2.astype(jnp.float32)) + b2


if __name__ == "__main__":
    B, S = 2, 8
    D_in, D_h, D_out = 32, 64, 32

    key = jax.random.PRNGKey(0)
    kx, kw1, kb1, kw2, kb2 = jax.random.split(key, 5)

    x = jax.random.normal(kx, (B, S, D_in), dtype=jnp.float32)

    # nn.Linear default init: U(-1/sqrt(fan_in), 1/sqrt(fan_in)); stored here
    # pre-transposed as [in, out] so the kernel does x @ W.
    lim1 = 1.0 / math.sqrt(D_in)
    w1 = jax.random.uniform(kw1, (D_in, D_h), jnp.float32, -lim1, lim1)
    b1 = jax.random.uniform(kb1, (D_h,), jnp.float32, -lim1, lim1)
    lim2 = 1.0 / math.sqrt(D_h)
    w2 = jax.random.uniform(kw2, (D_h, D_out), jnp.float32, -lim2, lim2)
    b2 = jax.random.uniform(kb2, (D_out,), jnp.float32, -lim2, lim2)
    # nn.LayerNorm default init: weight=1, bias=0
    gamma = jnp.ones((D_h,), jnp.float32)
    beta = jnp.zeros((D_h,), jnp.float32)

    out = jax.block_until_ready(ffn_layer(x, w1, b1, gamma, beta, w2, b2))

    ref = ffn_reference(x, w1, b1, gamma, beta, w2, b2)
    assert out.shape == (B, S, D_out)
    assert jnp.allclose(out, ref, atol=1e-5, rtol=1e-5), "mismatch vs reference"
    print("KERNEL_OK")
</pallas_src>

<mosaic_0001>
module attributes {stable_mosaic.version = 11 : i64} {
  func.func @_ffn_kernel(%arg0: i32, %arg1: memref<8x32xf32, #tpu.memory_space<vmem>>, %arg2: memref<32x64xf32, #tpu.memory_space<vmem>>, %arg3: memref<1x64xf32, #tpu.memory_space<vmem>>, %arg4: memref<1x64xf32, #tpu.memory_space<vmem>>, %arg5: memref<1x64xf32, #tpu.memory_space<vmem>>, %arg6: memref<64x32xf32, #tpu.memory_space<vmem>>, %arg7: memref<1x32xf32, #tpu.memory_space<vmem>>, %arg8: memref<8x32xf32, #tpu.memory_space<vmem>>) attributes {dimension_semantics = [#tpu.dimension_semantics<parallel>], iteration_bounds = array<i64: 2>, scalar_prefetch = 0 : i64, scratch_operands = 0 : i64, tpu.core_type = #tpu.core_type<tc>, window_params = [{transform_indices = @transform_0, window_bounds = array<i64: 8, 32>}, {pipeline_mode = #tpu.pipeline_mode<synchronous>, transform_indices = @transform_1, window_bounds = array<i64: 32, 64>}, {pipeline_mode = #tpu.pipeline_mode<synchronous>, transform_indices = @transform_2, window_bounds = array<i64: 1, 64>}, {pipeline_mode = #tpu.pipeline_mode<synchronous>, transform_indices = @transform_3, window_bounds = array<i64: 1, 64>}, {pipeline_mode = #tpu.pipeline_mode<synchronous>, transform_indices = @transform_4, window_bounds = array<i64: 1, 64>}, {pipeline_mode = #tpu.pipeline_mode<synchronous>, transform_indices = @transform_5, window_bounds = array<i64: 64, 32>}, {pipeline_mode = #tpu.pipeline_mode<synchronous>, transform_indices = @transform_6, window_bounds = array<i64: 1, 32>}, {transform_indices = @transform_7, window_bounds = array<i64: 8, 32>}]} {
    %c0 = arith.constant 0 : index
    %c0_0 = arith.constant 0 : index
    %0 = vector.load %arg1[%c0, %c0_0] : memref<8x32xf32, #tpu.memory_space<vmem>>, vector<8x32xf32>
    %c0_1 = arith.constant 0 : index
    %c0_2 = arith.constant 0 : index
    %1 = vector.load %arg2[%c0_1, %c0_2] : memref<32x64xf32, #tpu.memory_space<vmem>>, vector<32x64xf32>
    %cst = arith.constant dense<0.000000e+00> : vector<8x64xf32>
    %2 = tpu.matmul %0, %1, %cst {dimension_numbers = #tpu.dot_dimension_numbers<[1], [0], [0], [1], [0, 0, 1, 1], [], []>} : vector<8x32xf32>, vector<32x64xf32>, vector<8x64xf32> -> vector<8x64xf32>
    %c0_3 = arith.constant 0 : index
    %c0_4 = arith.constant 0 : index
    %3 = vector.load %arg3[%c0_3, %c0_4] : memref<1x64xf32, #tpu.memory_space<vmem>>, vector<1x64xf32>
    %4 = vector.broadcast %3 : vector<1x64xf32> to vector<8x64xf32>
    %5 = arith.addf %2, %4 : vector<8x64xf32>
    %cst_5 = arith.constant 0.707106769 : f32
    %6 = vector.broadcast %cst_5 : f32 to vector<8x64xf32>
    %7 = arith.mulf %5, %6 : vector<8x64xf32>
    %8 = math.erf %7 : vector<8x64xf32>
    %cst_6 = arith.constant 1.000000e+00 : f32
    %9 = vector.broadcast %cst_6 : f32 to vector<8x64xf32>
    %10 = arith.addf %9, %8 : vector<8x64xf32>
    %cst_7 = arith.constant 5.000000e-01 : f32
    %11 = vector.broadcast %cst_7 : f32 to vector<8x64xf32>
    %12 = arith.mulf %11, %10 : vector<8x64xf32>
    %13 = arith.mulf %5, %12 : vector<8x64xf32>
    %cst_8 = arith.constant dense<0.000000e+00> : vector<8xf32>
    %14 = vector.multi_reduction <add>, %13, %cst_8 [1] : vector<8x64xf32> to vector<8xf32>
    %15 = vector.shape_cast %14 : vector<8xf32> to vector<8x1xf32>
    %cst_9 = arith.constant 1.562500e-02 : f32
    %16 = vector.broadcast %cst_9 : f32 to vector<8x1xf32>
    %17 = arith.mulf %15, %16 : vector<8x1xf32>
    %18 = arith.mulf %13, %13 : vector<8x64xf32>
    %cst_10 = arith.constant dense<0.000000e+00> : vector<8xf32>
    %19 = vector.multi_reduction <add>, %18, %cst_10 [1] : vector<8x64xf32> to vector<8xf32>
    %20 = vector.shape_cast %19 : vector<8xf32> to vector<8x1xf32>
    %cst_11 = arith.constant 1.562500e-02 : f32
    %21 = vector.broadcast %cst_11 : f32 to vector<8x1xf32>
    %22 = arith.mulf %20, %21 : vector<8x1xf32>
    %23 = arith.mulf %17, %17 : vector<8x1xf32>
    %24 = arith.subf %22, %23 : vector<8x1xf32>
    %cst_12 = arith.constant 0.000000e+00 : f32
    %25 = vector.broadcast %cst_12 : f32 to vector<8x1xf32>
    %26 = arith.maximumf %24, %25 : vector<8x1xf32>
    %27 = vector.broadcast %17 : vector<8x1xf32> to vector<8x64xf32>
    %28 = arith.subf %13, %27 : vector<8x64xf32>
    %cst_13 = arith.constant 9.99999974E-6 : f32
    %29 = vector.broadcast %cst_13 : f32 to vector<8x1xf32>
    %30 = arith.addf %26, %29 : vector<8x1xf32>
    %31 = math.rsqrt %30 : vector<8x1xf32>
    %32 = vector.broadcast %31 : vector<8x1xf32> to vector<8x64xf32>
    %33 = arith.mulf %28, %32 : vector<8x64xf32>
    %c0_14 = arith.constant 0 : index
    %c0_15 = arith.constant 0 : index
    %34 = vector.load %arg4[%c0_14, %c0_15] : memref<1x64xf32, #tpu.memory_space<vmem>>, vector<1x64xf32>
    %35 = vector.broadcast %34 : vector<1x64xf32> to vector<8x64xf32>
    %36 = arith.mulf %33, %35 : vector<8x64xf32>
    %c0_16 = arith.constant 0 : index
    %c0_17 = arith.constant 0 : index
    %37 = vector.load %arg5[%c0_16, %c0_17] : memref<1x64xf32, #tpu.memory_space<vmem>>, vector<1x64xf32>
    %38 = vector.broadcast %37 : vector<1x64xf32> to vector<8x64xf32>
    %39 = arith.addf %36, %38 : vector<8x64xf32>
    %c0_18 = arith.constant 0 : index
    %c0_19 = arith.constant 0 : index
    %40 = vector.load %arg6[%c0_18, %c0_19] : memref<64x32xf32, #tpu.memory_space<vmem>>, vector<64x32xf32>
    %cst_20 = arith.constant dense<0.000000e+00> : vector<8x32xf32>
    %41 = tpu.matmul %39, %40, %cst_20 {dimension_numbers = #tpu.dot_dimension_numbers<[1], [0], [0], [1], [0, 0, 1, 1], [], []>} : vector<8x64xf32>, vector<64x32xf32>, vector<8x32xf32> -> vector<8x32xf32>
    %c0_21 = arith.constant 0 : index
    %c0_22 = arith.constant 0 : index
    %42 = vector.load %arg7[%c0_21, %c0_22] : memref<1x32xf32, #tpu.memory_space<vmem>>, vector<1x32xf32>
    %43 = vector.broadcast %42 : vector<1x32xf32> to vector<8x32xf32>
    %44 = arith.addf %41, %43 : vector<8x32xf32>
    %c0_23 = arith.constant 0 : index
    %c0_24 = arith.constant 0 : index
    %45 = vector.load %arg8[%c0_23, %c0_24] : memref<8x32xf32, #tpu.memory_space<vmem>>, vector<8x32xf32>
    tpu.vector_store %arg8[%c0_23, %c0_24], %44 {strides = array<i32>} : memref<8x32xf32, #tpu.memory_space<vmem>>, vector<8x32xf32>,
    return
  }
  func.func @transform_0(%arg0: i32) -> (i32, i32) {
    %c0_i32 = arith.constant 0 : i32
    %c0_i32_0 = arith.constant 0 : i32
    return %arg0, %c0_i32 : i32, i32
  }
  func.func @transform_1(%arg0: i32) -> (i32, i32) {
    %c0_i32 = arith.constant 0 : i32
    %c0_i32_0 = arith.constant 0 : i32
    %c0_i32_1 = arith.constant 0 : i32
    return %c0_i32, %c0_i32_0 : i32, i32
  }
  func.func @transform_2(%arg0: i32) -> (i32, i32) {
    %c0_i32 = arith.constant 0 : i32
    %c0_i32_0 = arith.constant 0 : i32
    %c0_i32_1 = arith.constant 0 : i32
    return %c0_i32, %c0_i32_0 : i32, i32
  }
  func.func @transform_3(%arg0: i32) -> (i32, i32) {
    %c0_i32 = arith.constant 0 : i32
    %c0_i32_0 = arith.constant 0 : i32
    %c0_i32_1 = arith.constant 0 : i32
    return %c0_i32, %c0_i32_0 : i32, i32
  }
  func.func @transform_4(%arg0: i32) -> (i32, i32) {
    %c0_i32 = arith.constant 0 : i32
    %c0_i32_0 = arith.constant 0 : i32
    %c0_i32_1 = arith.constant 0 : i32
    return %c0_i32, %c0_i32_0 : i32, i32
  }
  func.func @transform_5(%arg0: i32) -> (i32, i32) {
    %c0_i32 = arith.constant 0 : i32
    %c0_i32_0 = arith.constant 0 : i32
    %c0_i32_1 = arith.constant 0 : i32
    return %c0_i32, %c0_i32_0 : i32, i32
  }
  func.func @transform_6(%arg0: i32) -> (i32, i32) {
    %c0_i32 = arith.constant 0 : i32
    %c0_i32_0 = arith.constant 0 : i32
    %c0_i32_1 = arith.constant 0 : i32
    return %c0_i32, %c0_i32_0 : i32, i32
  }
  func.func @transform_7(%arg0: i32) -> (i32, i32) {
    %c0_i32 = arith.constant 0 : i32
    %c0_i32_0 = arith.constant 0 : i32
    return %arg0, %c0_i32 : i32, i32
  }
}

</mosaic_0001>

<llo_original>
// kernel: tpu_custom_call.1
$region0: #{tpu_custom_call.1}
  #allocation0 [shape = 'u32[]', space=smem, size = 0x4, offset = 0x4, fixed_abs, tag = 'smem constant byte address 0x4 - core index']
  #allocation1 [shape = 'u32[144,128]{1,0:T(1,128)}', space=vmem, size = 0x12000, scoped, tag = 'internal scratch']
  %s0 = inlined_call_operand.vmem [shape: f32[16,32], index: 0, kind: input, shape index: {}]
  %s1 = inlined_call_operand.vmem [shape: f32[32,64], index: 1, kind: input, shape index: {}]
  %s2 = inlined_call_operand.vmem [shape: f32[1,64], index: 2, kind: input, shape index: {}]
  %s3 = inlined_call_operand.vmem [shape: f32[1,64], index: 3, kind: input, shape index: {}]
  %s4 = inlined_call_operand.vmem [shape: f32[1,64], index: 4, kind: input, shape index: {}]
  %s5 = inlined_call_operand.vmem [shape: f32[64,32], index: 5, kind: input, shape index: {}]
  %s6 = inlined_call_operand.vmem [shape: f32[1,32], index: 6, kind: input, shape index: {}]
  %s7 = inlined_call_operand.hbm [shape: f32[16,32], index: 7, kind: output, shape index: {}]
  %s8 = sld [smem:[#allocation0]]
  $region61: #{tpu_custom_call.1} parent=0
    _
  %s10 = ssub.s32 1, %s8
  %s11 = scalar_select 0, %s10, %s8
  $region1: #{tpu_custom_call.1} parent=0
    #allocation2 [shape = 'u8[8192]{0}', space=vmem, size = 0x2000, scoped, tag = 'output window, operand 0']
    #allocation3 [shape = 's32[2]{0}', space=sflag, size = 0x8, scoped, tag = 'scoped memory for tpu_custom_call.1']
    %12 = vsyncpa [#allocation3], 0
    %s13 = scalar_lea.sflag [#allocation3], 1
    %14 = vsyncpa %s13, 0
    loop: start=0, step=1, limit=4
    $region2: #{tpu_custom_call.1} parent=1 // loop_pre_header
      _
    $region3: #{tpu_custom_call.1} parent=1 // loop_header
      %s16 = sphi 0, %s20
      %p17 = scmp.ge.s32.totalorder %s16, 4
      %s26 = sphi 0, %s28
      %s29 = sphi 0, %s26
      %s30 = sphi 0, %s29
      %s46 = sphi 0, %s30
      %s50 = sphi 0, %s50
      %s52 = sphi 0, %s50
      %s53 = sphi 0, %s52
      %s67 = sphi 0, %s53
      %s71 = sphi 0, %s71
      %s73 = sphi 0, %s71
      %s74 = sphi 0, %s73
      %s88 = sphi 0, %s74
      %s92 = sphi 0, %s92
      %s94 = sphi 0, %s92
      %s95 = sphi 0, %s94
      %s109 = sphi 0, %s95
      %s113 = sphi 0, %s113
      %s115 = sphi 0, %s113
      %s116 = sphi 0, %s115
      %s130 = sphi 0, %s116
      %s134 = sphi 0, %s134
      %s136 = sphi 0, %s134
      %s137 = sphi 0, %s136
      %s151 = sphi 0, %s137
      %s155 = sphi 0, %s155
      %s157 = sphi 0, %s155
      %s158 = sphi 0, %s157
      %s172 = sphi 0, %s158
      %s178 = sphi 0, %s180
      %s181 = sphi 0, %s178
      %s182 = sphi 0, %s181
      %s198 = sphi 0, %s182
    $region4: #{tpu_custom_call.1} parent=1 // loop_header_branch
      %19 = sbr.rel (%p17) target = $region8
    $region5: #{tpu_custom_call.1} parent=1 // loop_body
      %s21 = ssub.s32 %s16, 1
      %s22 = ssub.s32 %s16, 2
      %s23 = sadd.s32 %s16, 1
      %s24 = ssub.s32 %s16, %s23
      %p25 = scmp.eq.s32.totalorder %s24, 0
      %s27 = sadd.s32 %s26, 1
      %s28 = scalar_select %p25, %s26, %s27
      %p31 = pneg %p25
      %p32 = scmp.eq.s32.totalorder %s16, 1
      %p33 = por %p31, %p32
      %p34 = scmp.ne.s32.totalorder %s26, %s29
      %p35 = scmp.eq.s32.totalorder %s16, 0
      %p36 = por %p34, %p35
      %p37 = scmp.ne.s32.totalorder %s26, %s29
      %p38 = scmp.eq.s32.totalorder %s21, 1
      %p39 = por %p37, %p38
      %p40 = scmp.ne.s32.totalorder %s29, %s30
      %p41 = scmp.eq.s32.totalorder %s21, 0
      %p42 = por %p40, %p41
      %p43 = scmp.ne.s32.totalorder %s29, %s30
      %p44 = scmp.eq.s32.totalorder %s22, 1
      %p45 = por %p43, %p44
      %p47 = scmp.ne.s32.totalorder %s30, %s46
      %p48 = scmp.eq.s32.totalorder %s22, 0
      %p49 = por %p47, %p48
      %s51 = sadd.s32 %s50, 1
      %p54 = scmp.eq.s32.totalorder %s16, 1
      %p55 = scmp.ne.s32.totalorder %s50, %s52
      %p56 = scmp.eq.s32.totalorder %s16, 0
      %p57 = por %p55, %p56
      %p58 = scmp.ne.s32.totalorder %s50, %s52
      %p59 = scmp.eq.s32.totalorder %s21, 1
      %p60 = por %p58, %p59
      %p61 = scmp.ne.s32.totalorder %s52, %s53
      %p62 = scmp.eq.s32.totalorder %s21, 0
      %p63 = por %p61, %p62
      %p64 = scmp.ne.s32.totalorder %s52, %s53
      %p65 = scmp.eq.s32.totalorder %s22, 1
      %p66 = por %p64, %p65
      %p68 = scmp.ne.s32.totalorder %s53, %s67
      %p69 = scmp.eq.s32.totalorder %s22, 0
      %p70 = por %p68, %p69
      %s72 = sadd.s32 %s71, 1
      %p75 = scmp.eq.s32.totalorder %s16, 1
      %p76 = scmp.ne.s32.totalorder %s71, %s73
      %p77 = scmp.eq.s32.totalorder %s16, 0
      %p78 = por %p76, %p77
      %p79 = scmp.ne.s32.totalorder %s71, %s73
      %p80 = scmp.eq.s32.totalorder %s21, 1
      %p81 = por %p79, %p80
      %p82 = scmp.ne.s32.totalorder %s73, %s74
      %p83 = scmp.eq.s32.totalorder %s21, 0
      %p84 = por %p82, %p83
      %p85 = scmp.ne.s32.totalorder %s73, %s74
      %p86 = scmp.eq.s32.totalorder %s22, 1
      %p87 = por %p85, %p86
      %p89 = scmp.ne.s32.totalorder %s74, %s88
      %p90 = scmp.eq.s32.totalorder %s22, 0
      %p91 = por %p89, %p90
      %s93 = sadd.s32 %s92, 1
      %p96 = scmp.eq.s32.totalorder %s16, 1
      %p97 = scmp.ne.s32.totalorder %s92, %s94
      %p98 = scmp.eq.s32.totalorder %s16, 0
      %p99 = por %p97, %p98
      %p100 = scmp.ne.s32.totalorder %s92, %s94
      %p101 = scmp.eq.s32.totalorder %s21, 1
      %p102 = por %p100, %p101
      %p103 = scmp.ne.s32.totalorder %s94, %s95
      %p104 = scmp.eq.s32.totalorder %s21, 0
      %p105 = por %p103, %p104
      %p106 = scmp.ne.s32.totalorder %s94, %s95
      %p107 = scmp.eq.s32.totalorder %s22, 1
      %p108 = por %p106, %p107
      %p110 = scmp.ne.s32.totalorder %s95, %s109
      %p111 = scmp.eq.s32.totalorder %s22, 0
      %p112 = por %p110, %p111
      %s114 = sadd.s32 %s113, 1
      %p117 = scmp.eq.s32.totalorder %s16, 1
      %p118 = scmp.ne.s32.totalorder %s113, %s115
      %p119 = scmp.eq.s32.totalorder %s16, 0
      %p120 = por %p118, %p119
      %p121 = scmp.ne.s32.totalorder %s113, %s115
      %p122 = scmp.eq.s32.totalorder %s21, 1
      %p123 = por %p121, %p122
      %p124 = scmp.ne.s32.totalorder %s115, %s116
      %p125 = scmp.eq.s32.totalorder %s21, 0
      %p126 = por %p124, %p125
      %p127 = scmp.ne.s32.totalorder %s115, %s116
      %p128 = scmp.eq.s32.totalorder %s22, 1
      %p129 = por %p127, %p128
      %p131 = scmp.ne.s32.totalorder %s116, %s130
      %p132 = scmp.eq.s32.totalorder %s22, 0
      %p133 = por %p131, %p132
      %s135 = sadd.s32 %s134, 1
      %p138 = scmp.eq.s32.totalorder %s16, 1
      %p139 = scmp.ne.s32.totalorder %s134, %s136
      %p140 = scmp.eq.s32.totalorder %s16, 0
      %p141 = por %p139, %p140
      %p142 = scmp.ne.s32.totalorder %s134, %s136
      %p143 = scmp.eq.s32.totalorder %s21, 1
      %p144 = por %p142, %p143
      %p145 = scmp.ne.s32.totalorder %s136, %s137
      %p146 = scmp.eq.s32.totalorder %s21, 0
      %p147 = por %p145, %p146
      %p148 = scmp.ne.s32.totalorder %s136, %s137
      %p149 = scmp.eq.s32.totalorder %s22, 1
      %p150 = por %p148, %p149
      %p152 = scmp.ne.s32.totalorder %s137, %s151
      %p153 = scmp.eq.s32.totalorder %s22, 0
      %p154 = por %p152, %p153
      %s156 = sadd.s32 %s155, 1
      %p159 = scmp.eq.s32.totalorder %s16, 1
      %p160 = scmp.ne.s32.totalorder %s155, %s157
      %p161 = scmp.eq.s32.totalorder %s16, 0
      %p162 = por %p160, %p161
      %p163 = scmp.ne.s32.totalorder %s155, %s157
      %p164 = scmp.eq.s32.totalorder %s21, 1
      %p165 = por %p163, %p164
      %p166 = scmp.ne.s32.totalorder %s157, %s158
      %p167 = scmp.eq.s32.totalorder %s21, 0
      %p168 = por %p166, %p167
      %p169 = scmp.ne.s32.totalorder %s157, %s158
      %p170 = scmp.eq.s32.totalorder %s22, 1
      %p171 = por %p169, %p170
      %p173 = scmp.ne.s32.totalorder %s158, %s172
      %p174 = scmp.eq.s32.totalorder %s22, 0
      %p175 = por %p173, %p174
      %s176 = ssub.s32 %s16, %s23
      %p177 = scmp.eq.s32.totalorder %s176, 0
      %s179 = sadd.s32 %s178, 1
      %s180 = scalar_select %p177, %s178, %s179
      %p183 = pneg %p177
      %p184 = scmp.eq.s32.totalorder %s16, 1
      %p185 = por %p183, %p184
      %p186 = scmp.ne.s32.totalorder %s178, %s181
      %p187 = scmp.eq.s32.totalorder %s16, 0
      %p188 = por %p186, %p187
      %p189 = scmp.ne.s32.totalorder %s178, %s181
      %p190 = scmp.eq.s32.totalorder %s21, 1
      %p191 = por %p189, %p190
      %p192 = scmp.ne.s32.totalorder %s181, %s182
      %p193 = scmp.eq.s32.totalorder %s21, 0
      %p194 = por %p192, %p193
      %p195 = scmp.ne.s32.totalorder %s181, %s182
      %p196 = scmp.eq.s32.totalorder %s22, 1
      %p197 = por %p195, %p196
      %p199 = scmp.ne.s32.totalorder %s182, %s198
      %p200 = scmp.eq.s32.totalorder %s22, 0
      %p201 = por %p199, %p200
      %p202 = scmp.le.s32.totalorder 1, %s16
      %p203 = scmp.lt.s32.totalorder %s16, 3
      %p204 = pnand %p202, %p203
      %p205 = pneg %p204
      // Predicated region
      $region9: #{tpu_custom_call.1} parent=5 // pred_check
        _
      $region10: #{tpu_custom_call.1} parent=5 // pred_check_branch
        %207 = sbr.rel (%p204) target = $region12
      $region11: #{tpu_custom_call.1} parent=5 // pred_region
        %s208 = ssub.s32 %s16, 1
        // Predicated region
        $region13: #{tpu_custom_call.1} parent=11 // pred_check
          %p209 = pneg %p63
        $region14: #{tpu_custom_call.1} parent=11 // pred_check_branch
          %211 = sbr.rel (%p209) target = $region16
        $region15: #{tpu_custom_call.1} parent=11 // pred_region
          _
        $region16: #{tpu_custom_call.1} parent=11 // pred_fallthru
          _
        // Predicated region
        $region17: #{tpu_custom_call.1} parent=11 // pred_check
          %p212 = pneg %p84
        $region18: #{tpu_custom_call.1} parent=11 // pred_check_branch
          %214 = sbr.rel (%p212) target = $region20
        $region19: #{tpu_custom_call.1} parent=11 // pred_region
          _
        $region20: #{tpu_custom_call.1} parent=11 // pred_fallthru
          _
        // Predicated region
        $region21: #{tpu_custom_call.1} parent=11 // pred_check
          %p215 = pneg %p105
        $region22: #{tpu_custom_call.1} parent=11 // pred_check_branch
          %217 = sbr.rel (%p215) target = $region24
        $region23: #{tpu_custom_call.1} parent=11 // pred_region
          _
        $region24: #{tpu_custom_call.1} parent=11 // pred_fallthru
          _
        // Predicated region
        $region25: #{tpu_custom_call.1} parent=11 // pred_check
          %p218 = pneg %p126
        $region26: #{tpu_custom_call.1} parent=11 // pred_check_branch
          %220 = sbr.rel (%p218) target = $region28
        $region27: #{tpu_custom_call.1} parent=11 // pred_region
          _
        $region28: #{tpu_custom_call.1} parent=11 // pred_fallthru
          _
        // Predicated region
        $region29: #{tpu_custom_call.1} parent=11 // pred_check
          %p221 = pneg %p147
        $region30: #{tpu_custom_call.1} parent=11 // pred_check_branch
          %223 = sbr.rel (%p221) target = $region32
        $region31: #{tpu_custom_call.1} parent=11 // pred_region
          _
        $region32: #{tpu_custom_call.1} parent=11 // pred_fallthru
          _
        // Predicated region
        $region33: #{tpu_custom_call.1} parent=11 // pred_check
          %p224 = pneg %p168
        $region34: #{tpu_custom_call.1} parent=11 // pred_check_branch
          %226 = sbr.rel (%p224) target = $region36
        $region35: #{tpu_custom_call.1} parent=11 // pred_region
          _
        $region36: #{tpu_custom_call.1} parent=11 // pred_fallthru
          _
      $region12: #{tpu_custom_call.1} parent=5 // pred_fallthru
        _
      %p227 = scmp.lt.s32.totalorder %s16, 2
      // Predicated region
      $region37: #{tpu_custom_call.1} parent=5 // pred_check
        %p228 = pneg %p227
      $region38: #{tpu_custom_call.1} parent=5 // pred_check_branch
        %230 = sbr.rel (%p228) target = $region40
      $region39: #{tpu_custom_call.1} parent=5 // pred_region
        // Predicated region
        $region41: #{tpu_custom_call.1} parent=39 // pred_check
          %p231 = pneg %p36
        $region42: #{tpu_custom_call.1} parent=39 // pred_check_branch
          %233 = sbr.rel (%p231) target = $region44
        $region43: #{tpu_custom_call.1} parent=39 // pred_region
          %p234 = scmp.lt.s32.totalorder %s16, 1
          %s235 = scalar_select %p234, %s16, 1
          %s236 = smul.addr %s235, 8
          %s237 = scalar_lea.vmem %s0, %s236
        $region44: #{tpu_custom_call.1} parent=39 // pred_fallthru
          _
      $region40: #{tpu_custom_call.1} parent=5 // pred_fallthru
        _
      %p238 = scmp.le.s32.totalorder 1, %s16
      %p239 = scmp.lt.s32.totalorder %s16, 3
      %p240 = pnand %p238, %p239
      %p241 = pneg %p240
      // Predicated region
      $region45: #{tpu_custom_call.1} parent=5 // pred_check
        _
      $region46: #{tpu_custom_call.1} parent=5 // pred_check_branch
        %243 = sbr.rel (%p240) target = $region48
      $region47: #{tpu_custom_call.1} parent=5 // pred_region
        %s244 = ssub.s32 %s16, 1
        %p245 = scmp.lt.s32.totalorder %s21, 1
        %s246 = scalar_select %p245, %s21, 1
        %s247 = smul.addr %s246, 8
        %s248 = scalar_lea.vmem %s0, %s247
        %p249 = pneg %p42
        %p250 = pneg %p39
        %p251 = pneg %p63
        %p252 = pneg %p60
        %p253 = pneg %p84
        %p254 = pneg %p81
        %p255 = pneg %p105
        %p256 = pneg %p102
        %p257 = pneg %p126
        %p258 = pneg %p123
        %p259 = pneg %p147
        %p260 = pneg %p144
        %p261 = pneg %p168
        %p262 = pneg %p165
        %p263 = pneg %p194
        %p264 = pneg %p191
        %s265 = sand.u32 %s181, 1
        %s266 = scalar_lea.sflag [#allocation3], %s265
        %s267 = sand.u32 %s181, 1
        %s268 = smul.addr %s267, 8
        %s269 = scalar_lea.vmem [#allocation2], %s268
        %p270 = scmp.lt.s32.totalorder %s21, 1
        %s271 = scalar_select %p270, %s21, 1
        %s272 = smul.addr %s271, 8
        %s273 = scalar_lea.vmem %s0, %s272
        %v274 = vld [vmem:[%s273] sm:$0xff]
        %v275 = vld [vmem:[%s1] sm:$0xff]
        %v276 = vld [vmem:[%s1 + $0x8] sm:$0xff]
        %v277 = vld [vmem:[%s1 + $0x10] sm:$0xff]
        %v278 = vld [vmem:[%s1 + $0x18] sm:$0xff]
        %v279 = vld [vmem:[%s2] sm:$0x1]
        %v281 = vlaneseq
        %v282 = vshrl.u32 %v281, 7
        %v283 = vsub.s32 0, %v282
        %v284 = vrot.slane %v279, %v283
        %vm286 = vcmask 261120
        %v288 = vsel %vm286, %v274, 0
        %290 = vmatprep.subr.mxu0 0.0
        %291 = vmatpush1.msra.mxu0 %v275
        %292 = vmatprep.subr.mxu0 0.0
        %293 = vmatpush1.msra.mxu0 %v276
        %294 = vmatprep.subr.mxu0 0.0
        %295 = vmatpush1.msra.mxu0 %v277
        %296 = vmatprep.subr.mxu0 0.0
        %297 = vmatpush1.msra.mxu0 %v278
        %298 = vmatprep.subr.mxu0 0.0
        %299 = vmatpush1.msra.mxu0 0.0
        %300 = vmatprep.subr.mxu0 0.0
        %301 = vmatpush1.msra.mxu0 0.0
        %302 = vmatprep.subr.mxu0 0.0
        %303 = vmatpush1.msra.mxu0 0.0
        %304 = vmatprep.subr.mxu0 0.0
        %305 = vmatpush1.msra.mxu0 0.0
        %306 = vmatprep.subr.mxu0 0.0
        %307 = vmatpush1.msra.mxu0 0.0
        %308 = vmatprep.subr.mxu0 0.0
        %309 = vmatpush1.msra.mxu0 0.0
        %310 = vmatprep.subr.mxu0 0.0
        %311 = vmatpush1.msra.mxu0 0.0
        %312 = vmatprep.subr.mxu0 0.0
        %313 = vmatpush1.msra.mxu0 0.0
        %314 = vmatprep.subr.mxu0 0.0
        %315 = vmatpush1.msra.mxu0 0.0
        %316 = vmatprep.subr.mxu0 0.0
        %317 = vmatpush1.msra.mxu0 0.0
        %318 = vmatprep.subr.mxu0 0.0
        %319 = vmatpush1.msra.mxu0 0.0
        %320 = vmatprep.subr.mxu0 0.0
        %321 = vmatpush1.msra.mxu0 0.0
        %322 = vmatprep.subr.mxu0 0.0
        %323 = vmatpush1.msra.mxu0 0.0
        %324 = vmatprep.subr.mxu0 0.0
        %325 = vmatpush1.msra.mxu0 0.0
        %326 = vmatprep.subr.mxu0 0.0
        %327 = vmatpush1.msra.mxu0 0.0
        %328 = vmatprep.subr.mxu0 0.0
        %329 = vmatpush1.msra.mxu0 0.0
        %330 = vmatprep.subr.mxu0 0.0
        %331 = vmatpush1.msra.mxu0 0.0
        %332 = vmatprep.subr.mxu0 0.0
        %333 = vmatpush1.msra.mxu0 0.0
        %334 = vmatprep.subr.mxu0 0.0
        %335 = vmatpush1.msra.mxu0 0.0
        %336 = vmatprep.subr.mxu0 0.0
        %337 = vmatpush1.msra.mxu0 0.0
        %338 = vmatprep.subr.mxu0 0.0
        %339 = vmatpush1.msra.mxu0 0.0
        %340 = vmatprep.subr.mxu0 0.0
        %341 = vmatpush1.msra.mxu0 0.0
        %342 = vmatprep.subr.mxu0 0.0
        %343 = vmatpush1.msra.mxu0 0.0
        %344 = vmatprep.subr.mxu0 0.0
        %345 = vmatpush1.msra.mxu0 0.0
        %346 = vmatprep.subr.mxu0 0.0
        %347 = vmatpush1.msra.mxu0 0.0
        %348 = vmatprep.subr.mxu0 0.0
        %349 = vmatpush1.msra.mxu0 0.0
        %350 = vmatprep.subr.mxu0 0.0
        %351 = vmatpush1.msra.mxu0 0.0
        %352 = vmatprep.subr.mxu0 0.0
        %353 = vmatpush1.msra.mxu0 0.0
        %354 = vmatprep.mubr.f32.mxu0 0.0
        %355 = vmatmul.mubr.f32.gmra.mrb[0].mxu0 %v288
        %v356 = vpop.f32.mrb[0].mxu0
        %v357 = vadd.f32 %v284, %v356
        %v358 = vpop.f32.mrb[0].mxu0
        %359 = vdwg.mxu0
        %v360 = vmul.f32 %v357, 0.70710677
        %v361 = verf.f32.pop %v360
        %v362 = vadd.f32 %v361, 1.0
        %v363 = vmul.f32 %v362, 0.5
        %v364 = vmul.f32 %v357, %v363
        %vm365 = vcmask 523264
        %v366 = vsel %vm365, %v364, 0.0
        %367 = vadd.xlane.f32.xlu0 %v366
        %v368 = vpop.xlane.xlu0 %367
        %v369 = vmul.f32 %v368, 0.015625
        %v370 = vmul.f32 %v364, %v364
        %v371 = vsel %vm365, %v370, 0.0
        %372 = vadd.xlane.f32.xlu0 %v371
        %v373 = vpop.xlane.xlu0 %372
        %v374 = vmul.f32 %v373, 0.015625
        %v375 = vmul.f32 %v369, %v369
        %v376 = vsub.f32 %v374, %v375
        %v377 = vmax.f32 %v376, 0.0
        %v378 = vsub.f32 %v364, %v369
        %v379 = vadd.f32 %v377, 1e-05
        %v380 = vrsqrt.pop %v379
        %v381 = vmul.f32 %v378, %v380
        %v382 = vld [vmem:[%s3] sm:$0x1]
        %v384 = vlaneseq
        %v385 = vshrl.u32 %v384, 7
        %v386 = vsub.s32 0, %v385
        %v387 = vrot.slane %v382, %v386
        %v389 = vmul.f32 %v381, %v387
        %v390 = vld [vmem:[%s4] sm:$0x1]
        %v392 = vlaneseq
        %v393 = vshrl.u32 %v392, 7
        %v394 = vsub.s32 0, %v393
        %v395 = vrot.slane %v390, %v394
        %v397 = vadd.f32 %v389, %v395
        %v398 = vld [vmem:[%s5] sm:$0xff]
        %v399 = vld [vmem:[%s5 + $0x8] sm:$0xff]
        %v400 = vld [vmem:[%s5 + $0x10] sm:$0xff]
        %v401 = vld [vmem:[%s5 + $0x18] sm:$0xff]
        %v402 = vld [vmem:[%s5 + $0x20] sm:$0xff]
        %v403 = vld [vmem:[%s5 + $0x28] sm:$0xff]
        %v404 = vld [vmem:[%s5 + $0x30] sm:$0xff]
        %v405 = vld [vmem:[%s5 + $0x38] sm:$0xff]
        %v406 = vld [vmem:[%s6] sm:$0x1]
        %v408 = vlaneseq
        %v409 = vshrl.u32 %v408, 7
        %v410 = vsub.s32 0, %v409
        %v411 = vrot.slane %v406, %v410
        %v414 = vsel %vm365, %v397, 0
        %416 = vmatprep.subr.mxu0 0.0
        %417 = vmatpush1.msra.mxu0 %v398
        %418 = vmatprep.subr.mxu0 0.0
        %419 = vmatpush1.msra.mxu0 %v399
        %420 = vmatprep.subr.mxu0 0.0
        %421 = vmatpush1.msra.mxu0 %v400
        %422 = vmatprep.subr.mxu0 0.0
        %423 = vmatpush1.msra.mxu0 %v401
        %424 = vmatprep.subr.mxu0 0.0
        %425 = vmatpush1.msra.mxu0 %v402
        %426 = vmatprep.subr.mxu0 0.0
        %427 = vmatpush1.msra.mxu0 %v403
        %428 = vmatprep.subr.mxu0 0.0
        %429 = vmatpush1.msra.mxu0 %v404
        %430 = vmatprep.subr.mxu0 0.0
        %431 = vmatpush1.msra.mxu0 %v405
        %432 = vmatprep.subr.mxu0 0.0
        %433 = vmatpush1.msra.mxu0 0.0
        %434 = vmatprep.subr.mxu0 0.0
        %435 = vmatpush1.msra.mxu0 0.0
        %436 = vmatprep.subr.mxu0 0.0
        %437 = vmatpush1.msra.mxu0 0.0
        %438 = vmatprep.subr.mxu0 0.0
        %439 = vmatpush1.msra.mxu0 0.0
        %440 = vmatprep.subr.mxu0 0.0
        %441 = vmatpush1.msra.mxu0 0.0
        %442 = vmatprep.subr.mxu0 0.0
        %443 = vmatpush1.msra.mxu0 0.0
        %444 = vmatprep.subr.mxu0 0.0
        %445 = vmatpush1.msra.mxu0 0.0
        %446 = vmatprep.subr.mxu0 0.0
        %447 = vmatpush1.msra.mxu0 0.0
        %448 = vmatprep.subr.mxu0 0.0
        %449 = vmatpush1.msra.mxu0 0.0
        %450 = vmatprep.subr.mxu0 0.0
        %451 = vmatpush1.msra.mxu0 0.0
        %452 = vmatprep.subr.mxu0 0.0
        %453 = vmatpush1.msra.mxu0 0.0
        %454 = vmatprep.subr.mxu0 0.0
        %455 = vmatpush1.msra.mxu0 0.0
        %456 = vmatprep.subr.mxu0 0.0
        %457 = vmatpush1.msra.mxu0 0.0
        %458 = vmatprep.subr.mxu0 0.0
        %459 = vmatpush1.msra.mxu0 0.0
        %460 = vmatprep.subr.mxu0 0.0
        %461 = vmatpush1.msra.mxu0 0.0
        %462 = vmatprep.subr.mxu0 0.0
        %463 = vmatpush1.msra.mxu0 0.0
        %464 = vmatprep.subr.mxu0 0.0
        %465 = vmatpush1.msra.mxu0 0.0
        %466 = vmatprep.subr.mxu0 0.0
        %467 = vmatpush1.msra.mxu0 0.0
        %468 = vmatprep.subr.mxu0 0.0
        %469 = vmatpush1.msra.mxu0 0.0
        %470 = vmatprep.subr.mxu0 0.0
        %471 = vmatpush1.msra.mxu0 0.0
        %472 = vmatprep.subr.mxu0 0.0
        %473 = vmatpush1.msra.mxu0 0.0
        %474 = vmatprep.subr.mxu0 0.0
        %475 = vmatpush1.msra.mxu0 0.0
        %476 = vmatprep.subr.mxu0 0.0
        %477 = vmatpush1.msra.mxu0 0.0
        %478 = vmatprep.subr.mxu0 0.0
        %479 = vmatpush1.msra.mxu0 0.0
        %480 = vmatprep.mubr.f32.mxu0 0.0
        %481 = vmatmul.mubr.f32.gmra.mrb[0].mxu0 %v414
        %v482 = vpop.f32.mrb[0].mxu0
        %v483 = vadd.f32 %v411, %v482
        %v484 = vpop.f32.mrb[0].mxu0
        %485 = vdwg.mxu0
        %486 = vst.msk [vmem:[%s269] sm:$0xff] %vm286, %v483
        %s487 = sand.u32 %s181, 1
        %s488 = scalar_lea.sflag [#allocation3], %s487
        %s489 = sand.u32 %s181, 1
        %s490 = smul.addr %s489, 8
        %s491 = scalar_lea.vmem [#allocation2], %s490
        // Predicated region
        $region49: #{tpu_custom_call.1} parent=47 // pred_check
          %p492 = pneg %p191
        $region50: #{tpu_custom_call.1} parent=47 // pred_check_branch
          %494 = sbr.rel (%p492) target = $region52
        $region51: #{tpu_custom_call.1} parent=47 // pred_region
          %s496 = ssub.s32 128, 128
          %497 = vsyncadd %s488, %s496
          %s498 = smul.addr %s21, 128
          %s499 = scalar_lea.hbm %s7, %s498
          %s501 = sshll.u32 %s491, 4
          %s502 = int_to_ptr.vmem [resolvable:$true] %s501
          %504 = dma.vmem_to_hbm [thread:$0]  %s502, 128, %s499, %s488
        $region52: #{tpu_custom_call.1} parent=47 // pred_fallthru
          _
      $region48: #{tpu_custom_call.1} parent=5 // pred_fallthru
        _
      %p505 = scmp.le.s32.totalorder 2, %s16
      // Predicated region
      $region53: #{tpu_custom_call.1} parent=5 // pred_check
        %p506 = pneg %p505
      $region54: #{tpu_custom_call.1} parent=5 // pred_check_branch
        %508 = sbr.rel (%p506) target = $region56
      $region55: #{tpu_custom_call.1} parent=5 // pred_region
        %s509 = ssub.s32 %s16, 2
        // Predicated region
        $region57: #{tpu_custom_call.1} parent=55 // pred_check
          %p510 = pneg %p197
        $region58: #{tpu_custom_call.1} parent=55 // pred_check_branch
          %512 = sbr.rel (%p510) target = $region60
        $region59: #{tpu_custom_call.1} parent=55 // pred_region
          %s513 = sand.u32 %s182, 1
          %s514 = scalar_lea.sflag [#allocation3], %s513
          %s515 = sand.u32 %s182, 1
          %s516 = smul.addr %s515, 8
          %s517 = scalar_lea.vmem [#allocation2], %s516
          %518 = dma.done %s514, 128
        $region60: #{tpu_custom_call.1} parent=55 // pred_fallthru
          _
      $region56: #{tpu_custom_call.1} parent=5 // pred_fallthru
        _
    $region6: #{tpu_custom_call.1} parent=1 // loop_footer
      %s20 = sadd.s32 1, %s16
    $region7: #{tpu_custom_call.1} parent=1 // loop_footer_branch
      %15 = sbr.rel target = $region3
    $region8: #{tpu_custom_call.1} parent=1 // loop_exit
      _
    %519 = vsyncpa [#allocation3], 1
    %s520 = scalar_lea.sflag [#allocation3], 1
    %521 = vsyncpa %s520, 1

</llo_original>
